<compile_context>
chip_gen: v7x
topology: tpu7x:2x2x1
jax: 0.10.0
libtpu: 0.0.40
codegen_flags: <defaults>
</compile_context>

<pallas_src>
import functools

import jax
import jax.numpy as jnp
from jax import lax
from jax.experimental import pallas as pl
from jax.experimental.pallas import tpu as pltpu

LANES = 128


def _default_tile_rows():
    """Row-tile such that 2 inputs x 2 pipeline buffers fit default scoped VMEM.

    v6e / v7x : 8192 rows -> 4 MiB per input tile, 16 MiB pipelined (< 32 MiB).
    v5e / other / unknown: 4096 rows -> 8 MiB pipelined (< 16 MiB default).
    """
    kind = ""
    try:
        kind = jax.devices()[0].device_kind.lower()
    except Exception:
        pass
    if ("v6" in kind) or ("v7" in kind):
        return 8192
    return 4096


def _rate_loss_kernel(x_ref, y_ref, o_ref, acc_ref, *,
                      total_rows, tile_rows, blocks_per_split, last_block,
                      need_mask):
    c = pl.program_id(0)                       # core-split axis ("parallel")
    i = pl.program_id(1)                       # reduction axis ("arbitrary")
    block_idx = c * blocks_per_split + i       # logical row-block index

    @pl.when(i == 0)
    def _init():
        acc_ref[...] = jnp.zeros_like(acc_ref)

    diff = x_ref[...].astype(jnp.float32) - y_ref[...].astype(jnp.float32)
    # f32 sqrt lowers to a single EUP op; EUP has slack at HBM-bound rates.
    vals = jnp.sqrt(jnp.abs(diff))

    if need_mask:
        # Only the final (possibly ragged) block and the clamped duplicate
        # blocks past the end pay the iota + compare + select; every other
        # step is a plain per-lane VPU accumulate.
        @pl.when(block_idx < last_block)
        def _full():
            acc_ref[...] += jnp.sum(vals, axis=0, keepdims=True)

        @pl.when(block_idx >= last_block)
        def _ragged():
            row_ids = block_idx * tile_rows + lax.broadcasted_iota(
                jnp.int32, vals.shape, 0)
            masked = jnp.where(row_ids < total_rows, vals, jnp.float32(0.0))
            acc_ref[...] += jnp.sum(masked, axis=0, keepdims=True)
    else:
        acc_ref[...] += jnp.sum(vals, axis=0, keepdims=True)

    @pl.when(i == pl.num_programs(1) - 1)
    def _finalize():
        # Lane-dense (1, 128) per-core partial sums; cross-lane reduce and
        # the /n + 1 epilogue happen in the wrapper.
        o_ref[0] = acc_ref[...]


def _rate_loss_impl(x, y, tile_rows=None):
    """mean(sqrt(abs(x - y))) + 1 via a single-pass, dual-core Pallas reduction."""
    assert x.shape == y.shape, "x and y must have the same shape"
    n = x.size

    xf = jnp.ravel(x)   # contiguous ravel: bitcast, no HBM copy
    yf = jnp.ravel(y)

    rows = n // LANES
    rem = n - rows * LANES

    # Lane tail (< 128 elements): plain jnp in the wrapper, no jnp.pad copy.
    if rem:
        tx = xf[rows * LANES:].astype(jnp.float32)
        ty = yf[rows * LANES:].astype(jnp.float32)
        tail_sum = jnp.sum(jnp.sqrt(jnp.abs(tx - ty)))
    else:
        tail_sum = jnp.float32(0.0)

    if rows == 0:
        # Entire input fits in the tail path (n < 128).
        return tail_sum / jnp.float32(n) + jnp.float32(1.0)

    if rem:
        xm = xf[:rows * LANES]
        ym = yf[:rows * LANES]
    else:
        xm, ym = xf, yf
    x2d = xm.reshape(rows, LANES)
    y2d = ym.reshape(rows, LANES)

    if tile_rows is None:
        tile_rows = _default_tile_rows()
    tile_rows = min(int(tile_rows), rows)   # full-dim block if rows < tile_rows

    total_blocks = pl.cdiv(rows, tile_rows)
    num_splits = 2 if total_blocks >= 2 else 1   # 2 TCs on v7x; loop elsewhere
    bpc = pl.cdiv(total_blocks, num_splits)      # blocks per core
    last_block = total_blocks - 1
    need_mask = (rows % tile_rows != 0) or (total_blocks % num_splits != 0)

    kernel = functools.partial(
        _rate_loss_kernel,
        total_rows=rows,
        tile_rows=tile_rows,
        blocks_per_split=bpc,
        last_block=last_block,
        need_mask=need_mask,
    )

    def in_map(c, i):
        # Clamp so duplicate blocks (odd split) never DMA out of bounds; their
        # contribution is zeroed by the in-kernel row mask.
        return (jnp.minimum(c * bpc + i, last_block), 0)

    cost = pl.CostEstimate(
        flops=3 * n,
        transcendentals=n,
        bytes_accessed=n * (x.dtype.itemsize + y.dtype.itemsize)
        + num_splits * LANES * 4,
    )

    partials = pl.pallas_call(
        kernel,
        out_shape=jax.ShapeDtypeStruct((num_splits, 1, LANES), jnp.float32),
        grid_spec=pltpu.PrefetchScalarGridSpec(
            num_scalar_prefetch=0,
            grid=(num_splits, bpc),
            in_specs=[
                pl.BlockSpec((tile_rows, LANES), in_map),
                pl.BlockSpec((tile_rows, LANES), in_map),
            ],
            out_specs=pl.BlockSpec((1, 1, LANES), lambda c, i: (c, 0, 0)),
            scratch_shapes=[pltpu.VMEM((1, LANES), jnp.float32)],
        ),
        compiler_params=pltpu.CompilerParams(
            dimension_semantics=("parallel", "arbitrary"),
            # Only needed for the 8192-row tiles; stays well below the v7x cap.
            vmem_limit_bytes=(48 * 1024 * 1024 if tile_rows > 4096 else None),
        ),
        cost_estimate=cost,
    )(x2d, y2d)

    total = jnp.sum(partials) + tail_sum
    return total / jnp.float32(n) + jnp.float32(1.0)


rate_loss = jax.jit(_rate_loss_impl, static_argnames=("tile_rows",))


if __name__ == "__main__":
    key = jax.random.PRNGKey(0)
    kx, ky = jax.random.split(key)

    def ref_fn(a, b):
        return jnp.mean(jnp.sqrt(jnp.abs(a.astype(jnp.float32)
                                         - b.astype(jnp.float32)))) + 1.0

    # 1) Typical NCHW-like shape (single block, no masking path).
    x = jax.random.normal(kx, (2, 4, 16, 16), dtype=jnp.float32)
    y = jax.random.normal(ky, (2, 4, 16, 16), dtype=jnp.float32)
    loss = rate_loss(x, y)
    jax.block_until_ready(loss)
    assert jnp.allclose(loss, ref_fn(x, y), rtol=1e-5, atol=1e-5), (loss, ref_fn(x, y))

    # 2) Ragged row-blocks + 2-way core split + clamped duplicate block
    #    (tiny tile forces total_blocks=3 split over the size-2 parallel axis).
    x2 = jax.random.normal(kx, (2, 4, 16, 18), dtype=jnp.float32)
    y2 = jax.random.normal(ky, (2, 4, 16, 18), dtype=jnp.float32)
    loss2 = rate_loss(x2, y2, tile_rows=8)
    jax.block_until_ready(loss2)
    assert jnp.allclose(loss2, ref_fn(x2, y2), rtol=1e-5, atol=1e-5), (loss2, ref_fn(x2, y2))

    # 3) n % 128 != 0: kernel handles the full 128-lane rows, wrapper sums the tail.
    x3 = jax.random.normal(kx, (2, 3, 50), dtype=jnp.float32)
    y3 = jax.random.normal(ky, (2, 3, 50), dtype=jnp.float32)
    loss3 = rate_loss(x3, y3)
    jax.block_until_ready(loss3)
    assert jnp.allclose(loss3, ref_fn(x3, y3), rtol=1e-5, atol=1e-5), (loss3, ref_fn(x3, y3))

    # 4) n < 128: pure wrapper path.
    x4 = jax.random.normal(kx, (3, 5), dtype=jnp.float32)
    y4 = jax.random.normal(ky, (3, 5), dtype=jnp.float32)
    loss4 = rate_loss(x4, y4)
    jax.block_until_ready(loss4)
    assert jnp.allclose(loss4, ref_fn(x4, y4), rtol=1e-5, atol=1e-5), (loss4, ref_fn(x4, y4))

    print("KERNEL_OK")
</pallas_src>

<mosaic_0001>
module attributes {stable_mosaic.version = 11 : i64} {
  func.func @_rate_loss_kernel(%arg0: i32, %arg1: i32, %arg2: memref<16x128xf32, #tpu.memory_space<vmem>>, %arg3: memref<16x128xf32, #tpu.memory_space<vmem>>, %arg4: memref<1x1x128xf32, #tpu.memory_space<vmem>>, %arg5: memref<1x128xf32, #tpu.memory_space<vmem>>) attributes {dimension_semantics = [#tpu.dimension_semantics<parallel>, #tpu.dimension_semantics<arbitrary>], iteration_bounds = array<i64: 1, 1>, scalar_prefetch = 0 : i64, scratch_operands = 1 : i64, tpu.core_type = #tpu.core_type<tc>, window_params = [{transform_indices = @transform_0, window_bounds = array<i64: 16, 128>}, {transform_indices = @transform_1, window_bounds = array<i64: 16, 128>}, {transform_indices = @transform_2, window_bounds = array<i64: 1, 1, 128>}]} {
    %c0_i32 = arith.constant 0 : i32
    %0 = arith.cmpi eq, %arg1, %c0_i32 : i32
    %1 = arith.extui %0 : i1 to i32
    %c0_i32_0 = arith.constant 0 : i32
    %2 = arith.cmpi ne, %1, %c0_i32_0 : i32
    scf.if %2 {
      %cst_10 = arith.constant 0.000000e+00 : f32
      %16 = vector.broadcast %cst_10 : f32 to vector<1x128xf32>
      %c0_11 = arith.constant 0 : index
      %c0_12 = arith.constant 0 : index
      %17 = vector.load %arg5[%c0_11, %c0_12] : memref<1x128xf32, #tpu.memory_space<vmem>>, vector<1x128xf32>
      tpu.vector_store %arg5[%c0_11, %c0_12], %16 {strides = array<i32>} : memref<1x128xf32, #tpu.memory_space<vmem>>, vector<1x128xf32>,
    } else {
    }
    %c0 = arith.constant 0 : index
    %c0_1 = arith.constant 0 : index
    %3 = vector.load %arg2[%c0, %c0_1] : memref<16x128xf32, #tpu.memory_space<vmem>>, vector<16x128xf32>
    %c0_2 = arith.constant 0 : index
    %c0_3 = arith.constant 0 : index
    %4 = vector.load %arg3[%c0_2, %c0_3] : memref<16x128xf32, #tpu.memory_space<vmem>>, vector<16x128xf32>
    %5 = arith.subf %3, %4 : vector<16x128xf32>
    %6 = math.absf %5 : vector<16x128xf32>
    %7 = math.sqrt %6 : vector<16x128xf32>
    %c0_4 = arith.constant 0 : index
    %c0_5 = arith.constant 0 : index
    %8 = vector.load %arg5[%c0_4, %c0_5] : memref<1x128xf32, #tpu.memory_space<vmem>>, vector<1x128xf32>
    %cst = arith.constant dense<0.000000e+00> : vector<128xf32>
    %9 = vector.multi_reduction <add>, %7, %cst [0] : vector<16x128xf32> to vector<128xf32>
    %10 = vector.shape_cast %9 : vector<128xf32> to vector<1x128xf32>
    %11 = arith.addf %8, %10 : vector<1x128xf32>
    %c0_6 = arith.constant 0 : index
    %c0_7 = arith.constant 0 : index
    %12 = vector.load %arg5[%c0_6, %c0_7] : memref<1x128xf32, #tpu.memory_space<vmem>>, vector<1x128xf32>
    tpu.vector_store %arg5[%c0_6, %c0_7], %11 {strides = array<i32>} : memref<1x128xf32, #tpu.memory_space<vmem>>, vector<1x128xf32>,
    %c0_i32_8 = arith.constant 0 : i32
    %13 = arith.cmpi eq, %arg1, %c0_i32_8 : i32
    %14 = arith.extui %13 : i1 to i32
    %c0_i32_9 = arith.constant 0 : i32
    %15 = arith.cmpi ne, %14, %c0_i32_9 : i32
    scf.if %15 {
      %c0_10 = arith.constant 0 : index
      %c0_11 = arith.constant 0 : index
      %16 = vector.load %arg5[%c0_10, %c0_11] : memref<1x128xf32, #tpu.memory_space<vmem>>, vector<1x128xf32>
      %c0_12 = arith.constant 0 : index
      %c0_13 = arith.constant 0 : index
      %c0_14 = arith.constant 0 : index
      %17 = vector.load %arg4[%c0_12, %c0_13, %c0_14] : memref<1x1x128xf32, #tpu.memory_space<vmem>>, vector<1x1x128xf32>
      %18 = vector.shape_cast %17 : vector<1x1x128xf32> to vector<1x128xf32>
      %19 = vector.shape_cast %16 : vector<1x128xf32> to vector<1x1x128xf32>
      tpu.vector_store %arg4[%c0_12, %c0_13, %c0_14], %19 {strides = array<i32>} : memref<1x1x128xf32, #tpu.memory_space<vmem>>, vector<1x1x128xf32>,
    } else {
    }
    return
  }
  func.func @transform_0(%arg0: i32, %arg1: i32) -> (i32, i32) {
    %c1_i32 = arith.constant 1 : i32
    %0 = arith.muli %arg0, %c1_i32 : i32
    %1 = arith.addi %0, %arg1 : i32
    %c0_i32 = arith.constant 0 : i32
    %2 = arith.minsi %1, %c0_i32 : i32
    %c0_i32_0 = arith.constant 0 : i32
    %c0_i32_1 = arith.constant 0 : i32
    return %2, %c0_i32_0 : i32, i32
  }
  func.func @transform_1(%arg0: i32, %arg1: i32) -> (i32, i32) {
    %c1_i32 = arith.constant 1 : i32
    %0 = arith.muli %arg0, %c1_i32 : i32
    %1 = arith.addi %0, %arg1 : i32
    %c0_i32 = arith.constant 0 : i32
    %2 = arith.minsi %1, %c0_i32 : i32
    %c0_i32_0 = arith.constant 0 : i32
    %c0_i32_1 = arith.constant 0 : i32
    return %2, %c0_i32_0 : i32, i32
  }
  func.func @transform_2(%arg0: i32, %arg1: i32) -> (i32, i32, i32) {
    %c0_i32 = arith.constant 0 : i32
    %c0_i32_0 = arith.constant 0 : i32
    %c0_i32_1 = arith.constant 0 : i32
    return %arg0, %c0_i32, %c0_i32_0 : i32, i32, i32
  }
}

</mosaic_0001>

<llo_original>
// kernel: _rate_loss_impl.1
$region0: #{_rate_loss_impl.1}
  #allocation0 [shape = 'u32[]', space=smem, size = 0x4, offset = 0x4, fixed_abs, tag = 'smem constant byte address 0x4 - core index']
  #allocation1 [shape = 'u32[144,128]{1,0:T(1,128)}', space=vmem, size = 0x12000, scoped, tag = 'internal scratch']
  #allocation2 [shape = 'f32[1,128]{1,0:T(1,128)}', space=vmem, size = 0x200, scoped, tag = 'scratch operand']
  %s0 = inlined_call_operand.vmem [shape: f32[16,128], index: 0, kind: input, shape index: {}]
  %s1 = inlined_call_operand.vmem [shape: f32[16,128], index: 1, kind: input, shape index: {}]
  %s2 = inlined_call_operand.vmem [shape: f32[1,1,128], index: 2, kind: output, shape index: {}]
  %s3 = sld [smem:[#allocation0]]
  $region26: #{_rate_loss_impl.1} parent=0
    _
  %s5 = ssub.s32 1, %s3
  %s6 = scalar_select 0, %s5, %s3
  // Predicated region
  $region2: #{_rate_loss_impl.1} parent=0 // pred_check
    _
  $region3: #{_rate_loss_impl.1} parent=0 // pred_check_branch
    %8 = sbr.rel (0) target = $region5
  $region4: #{_rate_loss_impl.1} parent=0 // pred_region
    %s9 = sadd.s32 0, 0
    %p10 = scmp.lt.s32.totalorder %s9, 0
    %s11 = scalar_select %p10, %s9, 0
    %s12 = smul.u32 2, %s11
    %p13 = scmp.lt.s32.totalorder %s12, 1
    %s14 = scalar_select %p13, %s12, 1
    %s15 = smul.addr %s14, 8
    %s16 = scalar_lea.vmem %s0, %s15
    %s17 = sadd.s32 0, 0
    %p18 = scmp.lt.s32.totalorder %s17, 0
    %s19 = scalar_select %p18, %s17, 0
    %s20 = smul.u32 2, %s19
  $region5: #{_rate_loss_impl.1} parent=0 // pred_fallthru
    _
  // Predicated region
  $region6: #{_rate_loss_impl.1} parent=0 // pred_check
    _
  $region7: #{_rate_loss_impl.1} parent=0 // pred_check_branch
    %22 = sbr.rel (0) target = $region9
  $region8: #{_rate_loss_impl.1} parent=0 // pred_region
    %s23 = sadd.s32 0, 0
    %p24 = scmp.lt.s32.totalorder %s23, 0
    %s25 = scalar_select %p24, %s23, 0
    %s26 = smul.u32 2, %s25
    %p27 = scmp.lt.s32.totalorder %s26, 1
    %s28 = scalar_select %p27, %s26, 1
    %s29 = smul.addr %s28, 8
    %s30 = scalar_lea.vmem %s1, %s29
    %s31 = sadd.s32 0, 0
    %p32 = scmp.lt.s32.totalorder %s31, 0
    %s33 = scalar_select %p32, %s31, 0
    %s34 = smul.u32 2, %s33
  $region9: #{_rate_loss_impl.1} parent=0 // pred_fallthru
    _
  %s35 = sadd.s32 0, 0
  %p36 = scmp.lt.s32.totalorder %s35, 0
  %s37 = scalar_select %p36, %s35, 0
  %s38 = smul.u32 2, %s37
  %p39 = scmp.lt.s32.totalorder %s38, 1
  %s40 = scalar_select %p39, %s38, 1
  %s41 = smul.addr %s40, 8
  %s42 = scalar_lea.vmem %s0, %s41
  %s43 = sadd.s32 0, 0
  %p44 = scmp.lt.s32.totalorder %s43, 0
  %s45 = scalar_select %p44, %s43, 0
  %s46 = smul.u32 2, %s45
  %p47 = scmp.lt.s32.totalorder %s46, 1
  %s48 = scalar_select %p47, %s46, 1
  %s49 = smul.addr %s48, 8
  %s50 = scalar_lea.vmem %s1, %s49
  %s51 = sadd.s32 0, 0
  %p52 = scmp.lt.s32.totalorder %s51, 0
  %s53 = scalar_select %p52, %s51, 0
  %s54 = smul.u32 2, %s53
  %p55 = scmp.lt.s32.totalorder %s54, 1
  %s56 = scalar_select %p55, %s54, 1
  %s57 = smul.addr %s56, 8
  %s58 = scalar_lea.vmem %s0, %s57
  %s59 = sadd.s32 0, 0
  %p60 = scmp.lt.s32.totalorder %s59, 0
  %s61 = scalar_select %p60, %s59, 0
  %s62 = smul.u32 2, %s61
  %s63 = sadd.s32 0, 0
  %p64 = scmp.lt.s32.totalorder %s63, 0
  %s65 = scalar_select %p64, %s63, 0
  %s66 = smul.u32 2, %s65
  %p67 = scmp.lt.s32.totalorder %s66, 1
  %s68 = scalar_select %p67, %s66, 1
  %s69 = smul.addr %s68, 8
  %s70 = scalar_lea.vmem %s1, %s69
  %s71 = sadd.s32 0, 0
  %p72 = scmp.lt.s32.totalorder %s71, 0
  %s73 = scalar_select %p72, %s71, 0
  %s74 = smul.u32 2, %s73
  %p75 = scmp.eq.s32.totalorder 0, 0
  // Predicated region
  $region10: #{_rate_loss_impl.1} parent=0 // pred_check
    %p76 = pneg %p75
  $region11: #{_rate_loss_impl.1} parent=0 // pred_check_branch
    %78 = sbr.rel (%p76) target = $region13
  $region12: #{_rate_loss_impl.1} parent=0 // pred_region
    %79 = vst [vmem:[#allocation2] sm:$0x1] 0.0
  $region13: #{_rate_loss_impl.1} parent=0 // pred_fallthru
    _
  %v80 = vld [vmem:[%s58] sm:$0xff]
  %v81 = vld [vmem:[%s58 + $0x8] sm:$0xff]
  %v82 = vld [vmem:[%s70] sm:$0xff]
  %v83 = vld [vmem:[%s70 + $0x8] sm:$0xff]
  %v84 = vsub.f32 %v80, %v82
  %v85 = vsub.f32 %v81, %v83
  %v86 = vand.u32 2147483647, %v84
  %v87 = vand.u32 2147483647, %v85
  %v88 = vrsqrt.pop %v86
  %v89 = vmul.f32 %v86, %v88
  %vm90 = vcmp.eq.f32.partialorder %v86, inf
  %v91 = vsel %vm90, %v86, %v89
  %vm92 = vcmp.eq.f32.partialorder %v86, 0.0
  %v93 = vand.u32 %v86, 2147483648
  %v94 = vsel %vm92, %v93, %v91
  %v95 = vrsqrt.pop %v87
  %v96 = vmul.f32 %v87, %v95
  %vm97 = vcmp.eq.f32.partialorder %v87, inf
  %v98 = vsel %vm97, %v87, %v96
  %vm99 = vcmp.eq.f32.partialorder %v87, 0.0
  %v100 = vand.u32 %v87, 2147483648
  %v101 = vsel %vm99, %v100, %v98
  %v102 = vld [vmem:[#allocation2] sm:$0x1]
  %v103 = vadd.f32 %v94, %v101
  %v104 = vrot.slane %v103, 4
  %v105 = vadd.f32 %v103, %v104
  %v106 = vrot.slane %v105, 2
  %v107 = vadd.f32 %v105, %v106
  %v108 = vrot.slane %v107, 1
  %v109 = vadd.f32 %v107, %v108
  %v110 = vadd.f32 %v102, %v109
  %111 = vst [vmem:[#allocation2] sm:$0x1] %v110
  // Predicated region
  $region14: #{_rate_loss_impl.1} parent=0 // pred_check
    %p112 = pneg %p75
  $region15: #{_rate_loss_impl.1} parent=0 // pred_check_branch
    %114 = sbr.rel (%p112) target = $region17
  $region16: #{_rate_loss_impl.1} parent=0 // pred_region
    %v115 = vld [vmem:[#allocation2] sm:$0x1]
    %116 = vst [vmem:[%s2] sm:$0x1] %v115
  $region17: #{_rate_loss_impl.1} parent=0 // pred_fallthru
    _
  // Predicated region
  $region18: #{_rate_loss_impl.1} parent=0 // pred_check
    _
  $region19: #{_rate_loss_impl.1} parent=0 // pred_check_branch
    %118 = sbr.rel (0) target = $region21
  $region20: #{_rate_loss_impl.1} parent=0 // pred_region
    _
  $region21: #{_rate_loss_impl.1} parent=0 // pred_fallthru
    _
  // Predicated region
  $region22: #{_rate_loss_impl.1} parent=0 // pred_check
    _
  $region23: #{_rate_loss_impl.1} parent=0 // pred_check_branch
    %120 = sbr.rel (0) target = $region25
  $region24: #{_rate_loss_impl.1} parent=0 // pred_region
    _
  $region25: #{_rate_loss_impl.1} parent=0 // pred_fallthru
    _

</llo_original>
